<compile_context>
chip_gen: v6e
topology: v6e:2x2x1
jax: 0.10.0
libtpu: 0.0.40
codegen_flags: <defaults>
</compile_context>

<pallas_src>
import functools

import numpy as np
import jax
import jax.numpy as jnp
from jax.experimental import pallas as pl
from jax.experimental.pallas import tpu as pltpu


# -----------------------------------------------------------------------------
# Host-side setup glue (equivalent of DC3.__init__ for changing_feature='b').
# -----------------------------------------------------------------------------
def _pivoted_qr_perm(A):
    """Greedy Householder QR with column pivoting; returns the pivot order."""
    R = np.array(A, dtype=np.float64, copy=True)
    m, n = R.shape
    perm = np.arange(n)
    for k in range(min(m, n)):
        norms = np.linalg.norm(R[k:, k:], axis=0)
        j = k + int(np.argmax(norms))
        R[:, [k, j]] = R[:, [j, k]]
        perm[[k, j]] = perm[[j, k]]
        x = R[k:, k].copy()
        nx = np.linalg.norm(x)
        if nx > 1e-12:
            v = x
            v[0] += (np.sign(x[0]) if x[0] != 0 else 1.0) * nx
            v = v / np.linalg.norm(v)
            R[k:, :] -= 2.0 * np.outer(v, v @ R[k:, :])
    return perm


def make_dc3_params(A, nonnegative_mask, lr, momentum, changing_feature="b"):
    """Deterministic __init__ equivalent + folded kernel matrices."""
    if changing_feature != "b":
        # Matches the PyTorch module: only the 'b' path is implemented.
        raise NotImplementedError("changing_feature must be 'b'")
    A = np.asarray(A, dtype=np.float64)
    mask = np.asarray(nonnegative_mask, dtype=bool)
    constr_num, var_num = A.shape

    # G = row-selection matrix over nonnegative variables; h = 0 (scalar).
    cols = np.nonzero(mask)[0]
    q = len(cols)
    G = np.zeros((q, var_num), dtype=np.float64)
    G[np.arange(q), cols] = 1.0
    h = 0.0

    # Pivoted-QR split of the equality constraints.
    perm = _pivoted_qr_perm(A)
    r = int(np.linalg.matrix_rank(A))
    other_vars = perm[:r]
    partial_vars = perm[r:]
    A_other_inv = np.linalg.inv(A[:, other_vars])
    A_partial = A[:, partial_vars]
    M_mat = A_other_inv @ A_partial                         # (M, P)
    G_eff = G[:, partial_vars] - G[:, other_vars] @ M_mat   # (Q, P)
    G_other_t = G[:, other_vars].T                          # (M, Q)

    # Folded matrices used by the kernel.
    n = var_num
    U_x = np.zeros((n, q), dtype=np.float64)
    U_x[partial_vars, :] = G_eff.T                          # x @ U_x == x_partial @ G_eff.T
    W_h = A_other_inv.T @ G_other_t                         # (M, Q)
    C = np.zeros((q, n), dtype=np.float64)
    C[:, partial_vars] = 2.0 * G_eff
    C[:, other_vars] = -2.0 * (G_eff @ M_mat.T)
    C_lr = lr * C                                           # (Q, N)

    return dict(
        # raw buffers (for the reference path)
        other_vars=other_vars.astype(np.int64),
        partial_vars=partial_vars.astype(np.int64),
        A_other_inv_np=A_other_inv,
        A_partial_np=A_partial,
        G_effective_np=G_eff,
        G_other_t_np=G_other_t,
        h=float(h),
        lr=float(lr),
        momentum=float(momentum),
        # folded matrices (for the kernel)
        U_x=jnp.asarray(U_x, dtype=jnp.float32),
        W_h=jnp.asarray(W_h, dtype=jnp.float32),
        C_lr=jnp.asarray(C_lr, dtype=jnp.float32),
    )


# -----------------------------------------------------------------------------
# Pallas kernel: batch-tiled streaming forward step.
# -----------------------------------------------------------------------------
def dc3_kernel(x_ref, b_ref, old_ref, ux_ref, wh_ref, c_ref,
               xnew_ref, step_ref, *, momentum, h):
    x = x_ref[...]                                                  # (TB, N)
    # z = x_partial @ G_eff.T - h_eff  (permutation folded into U_x / W_h)
    z = jnp.dot(x, ux_ref[...], preferred_element_type=jnp.float32)        # (TB, Q)
    z = z + jnp.dot(b_ref[...], wh_ref[...], preferred_element_type=jnp.float32)
    z = z - h
    r = jnp.maximum(z, 0.0)                                         # (TB, Q)
    # new_x_step = lr * x_step + momentum * old_x_step  (scatter folded into C_lr)
    step = jnp.dot(r, c_ref[...], preferred_element_type=jnp.float32) \
        + momentum * old_ref[...]                                   # (TB, N)
    step_ref[...] = step
    xnew_ref[...] = x - step


def _round_up(a, m):
    return ((a + m - 1) // m) * m


def dc3_forward(x, b, old_x_step, params, G_old=None, *, block_b=512):
    """Equivalent of DC3.forward(x, b, G_old) for changing_feature='b'.

    Returns (x_new, new_x_step); the caller carries new_x_step as the
    momentum state (the module stores it in self.old_x_step).
    `G_old` is accepted for API parity but unused (matches the module).
    """
    del G_old
    U_x, W_h, C_lr = params["U_x"], params["W_h"], params["C_lr"]
    momentum, h = params["momentum"], params["h"]

    x = x.astype(jnp.float32)
    b = b.astype(jnp.float32)
    old_x_step = old_x_step.astype(jnp.float32)

    bsz, n = x.shape
    m_eq = b.shape[1]
    q = U_x.shape[1]

    # Batch-tile size: multiple of 8 (sublane), capped by the padded batch.
    tb = min(block_b, _round_up(bsz, 8))
    tb = _round_up(tb, 8)
    b_pad = _round_up(bsz, tb)
    if b_pad != bsz:
        pad = b_pad - bsz
        x_p = jnp.pad(x, ((0, pad), (0, 0)))
        b_p = jnp.pad(b, ((0, pad), (0, 0)))
        old_p = jnp.pad(old_x_step, ((0, pad), (0, 0)))
    else:
        x_p, b_p, old_p = x, b, old_x_step

    kernel = functools.partial(dc3_kernel, momentum=momentum, h=h)

    x_new, new_step = pl.pallas_call(
        kernel,
        out_shape=(jax.ShapeDtypeStruct((b_pad, n), jnp.float32),
                   jax.ShapeDtypeStruct((b_pad, n), jnp.float32)),
        grid=(b_pad // tb,),
        in_specs=[
            pl.BlockSpec((tb, n), lambda i: (i, 0)),      # x
            pl.BlockSpec((tb, m_eq), lambda i: (i, 0)),   # b
            pl.BlockSpec((tb, n), lambda i: (i, 0)),      # old_x_step
            pl.BlockSpec((n, q), lambda i: (0, 0)),       # U_x (shared)
            pl.BlockSpec((m_eq, q), lambda i: (0, 0)),    # W_h (shared)
            pl.BlockSpec((q, n), lambda i: (0, 0)),       # C_lr (shared)
        ],
        out_specs=(pl.BlockSpec((tb, n), lambda i: (i, 0)),
                   pl.BlockSpec((tb, n), lambda i: (i, 0))),
        compiler_params=pltpu.CompilerParams(
            dimension_semantics=("parallel",)),
    )(x_p, b_p, old_p, U_x, W_h, C_lr)

    return x_new[:bsz], new_step[:bsz]


# -----------------------------------------------------------------------------
# Pure-numpy reference (mirrors the PyTorch forward exactly).
# -----------------------------------------------------------------------------
def ref_forward(x, b, old, params):
    other = params["other_vars"]
    partial = params["partial_vars"]
    Ainv = params["A_other_inv_np"]
    Ap = params["A_partial_np"]
    G_eff = params["G_effective_np"]
    G_ot = params["G_other_t_np"]
    h, lr, momentum = params["h"], params["lr"], params["momentum"]
    x = np.asarray(x, dtype=np.float64)
    b = np.asarray(b, dtype=np.float64)
    old = np.asarray(old, dtype=np.float64)

    h_eff = h - b @ Ainv.T @ G_ot
    grad = 2.0 * np.maximum(x[:, partial] @ G_eff.T - h_eff, 0.0) @ G_eff
    x_step = np.zeros_like(x)
    x_step[:, partial] = grad
    x_step[:, other] = -(grad @ Ap.T) @ Ainv.T
    new_step = lr * x_step + momentum * old
    return x - new_step, new_step


if __name__ == "__main__":
    # Small synthetic problem consistent with the module:
    #   A: (constr_num, var_num) = (4, 12), full row rank
    #   nonnegative_mask selects Q=7 variables -> G: (7, 12), h = 0
    #   x: (B, 12), b: (B, 4)
    bsz, constr_num, var_num = 16, 4, 12
    lr, momentum = 0.1, 0.9

    key = jax.random.PRNGKey(0)
    kA, kx, kb = jax.random.split(key, 3)
    A = np.asarray(jax.random.normal(kA, (constr_num, var_num), dtype=jnp.float32),
                   dtype=np.float64)
    nonnegative_mask = np.array([1, 0, 1, 1, 0, 1, 0, 1, 1, 0, 1, 0], dtype=bool)

    params = make_dc3_params(A, nonnegative_mask, lr, momentum, changing_feature="b")

    x0 = jax.random.normal(kx, (bsz, var_num), dtype=jnp.float32)
    b_rhs = jax.random.normal(kb, (bsz, constr_num), dtype=jnp.float32)
    old0 = jnp.zeros((bsz, var_num), dtype=jnp.float32)   # module init: old_x_step = 0

    # Two forward steps to exercise the momentum (old_x_step) path.
    # block_b=8 -> grid of 2 batch tiles at this toy size (sweep larger on real B).
    x1, step1 = dc3_forward(x0, b_rhs, old0, params, block_b=8)
    x2, step2 = dc3_forward(x1, b_rhs, step1, params, block_b=8)
    x2 = jax.block_until_ready(x2)

    x1_ref, s1_ref = ref_forward(x0, b_rhs, old0, params)
    x2_ref, s2_ref = ref_forward(x1_ref, b_rhs, s1_ref, params)

    np.testing.assert_allclose(np.asarray(x1), x1_ref, rtol=2e-3, atol=2e-3)
    np.testing.assert_allclose(np.asarray(step1), s1_ref, rtol=2e-3, atol=2e-3)
    np.testing.assert_allclose(np.asarray(x2), x2_ref, rtol=2e-3, atol=2e-3)
    np.testing.assert_allclose(np.asarray(step2), s2_ref, rtol=2e-3, atol=2e-3)

    print("KERNEL_OK")
</pallas_src>

<mosaic_0001>
module attributes {stable_mosaic.version = 11 : i64} {
  func.func @dc3_kernel(%arg0: i32, %arg1: memref<8x12xf32, #tpu.memory_space<vmem>>, %arg2: memref<8x4xf32, #tpu.memory_space<vmem>>, %arg3: memref<8x12xf32, #tpu.memory_space<vmem>>, %arg4: memref<12x7xf32, #tpu.memory_space<vmem>>, %arg5: memref<4x7xf32, #tpu.memory_space<vmem>>, %arg6: memref<7x12xf32, #tpu.memory_space<vmem>>, %arg7: memref<8x12xf32, #tpu.memory_space<vmem>>, %arg8: memref<8x12xf32, #tpu.memory_space<vmem>>) attributes {dimension_semantics = [#tpu.dimension_semantics<parallel>], iteration_bounds = array<i64: 2>, scalar_prefetch = 0 : i64, scratch_operands = 0 : i64, tpu.core_type = #tpu.core_type<tc>, window_params = [{transform_indices = @transform_0, window_bounds = array<i64: 8, 12>}, {transform_indices = @transform_1, window_bounds = array<i64: 8, 4>}, {transform_indices = @transform_2, window_bounds = array<i64: 8, 12>}, {pipeline_mode = #tpu.pipeline_mode<synchronous>, transform_indices = @transform_3, window_bounds = array<i64: 12, 7>}, {pipeline_mode = #tpu.pipeline_mode<synchronous>, transform_indices = @transform_4, window_bounds = array<i64: 4, 7>}, {pipeline_mode = #tpu.pipeline_mode<synchronous>, transform_indices = @transform_5, window_bounds = array<i64: 7, 12>}, {transform_indices = @transform_6, window_bounds = array<i64: 8, 12>}, {transform_indices = @transform_7, window_bounds = array<i64: 8, 12>}]} {
    %c0 = arith.constant 0 : index
    %c0_0 = arith.constant 0 : index
    %0 = vector.load %arg1[%c0, %c0_0] : memref<8x12xf32, #tpu.memory_space<vmem>>, vector<8x12xf32>
    %c0_1 = arith.constant 0 : index
    %c0_2 = arith.constant 0 : index
    %1 = vector.load %arg4[%c0_1, %c0_2] : memref<12x7xf32, #tpu.memory_space<vmem>>, vector<12x7xf32>
    %cst = arith.constant dense<0.000000e+00> : vector<8x7xf32>
    %2 = tpu.matmul %0, %1, %cst {dimension_numbers = #tpu.dot_dimension_numbers<[1], [0], [0], [1], [0, 0, 1, 1], [], []>} : vector<8x12xf32>, vector<12x7xf32>, vector<8x7xf32> -> vector<8x7xf32>
    %c0_3 = arith.constant 0 : index
    %c0_4 = arith.constant 0 : index
    %3 = vector.load %arg2[%c0_3, %c0_4] : memref<8x4xf32, #tpu.memory_space<vmem>>, vector<8x4xf32>
    %c0_5 = arith.constant 0 : index
    %c0_6 = arith.constant 0 : index
    %4 = vector.load %arg5[%c0_5, %c0_6] : memref<4x7xf32, #tpu.memory_space<vmem>>, vector<4x7xf32>
    %cst_7 = arith.constant dense<0.000000e+00> : vector<8x7xf32>
    %5 = tpu.matmul %3, %4, %cst_7 {dimension_numbers = #tpu.dot_dimension_numbers<[1], [0], [0], [1], [0, 0, 1, 1], [], []>} : vector<8x4xf32>, vector<4x7xf32>, vector<8x7xf32> -> vector<8x7xf32>
    %6 = arith.addf %2, %5 : vector<8x7xf32>
    %cst_8 = arith.constant 0.000000e+00 : f32
    %7 = vector.broadcast %cst_8 : f32 to vector<8x7xf32>
    %8 = arith.subf %6, %7 : vector<8x7xf32>
    %cst_9 = arith.constant 0.000000e+00 : f32
    %9 = vector.broadcast %cst_9 : f32 to vector<8x7xf32>
    %10 = arith.maximumf %8, %9 : vector<8x7xf32>
    %c0_10 = arith.constant 0 : index
    %c0_11 = arith.constant 0 : index
    %11 = vector.load %arg6[%c0_10, %c0_11] : memref<7x12xf32, #tpu.memory_space<vmem>>, vector<7x12xf32>
    %cst_12 = arith.constant dense<0.000000e+00> : vector<8x12xf32>
    %12 = tpu.matmul %10, %11, %cst_12 {dimension_numbers = #tpu.dot_dimension_numbers<[1], [0], [0], [1], [0, 0, 1, 1], [], []>} : vector<8x7xf32>, vector<7x12xf32>, vector<8x12xf32> -> vector<8x12xf32>
    %c0_13 = arith.constant 0 : index
    %c0_14 = arith.constant 0 : index
    %13 = vector.load %arg3[%c0_13, %c0_14] : memref<8x12xf32, #tpu.memory_space<vmem>>, vector<8x12xf32>
    %cst_15 = arith.constant 0.899999976 : f32
    %14 = vector.broadcast %cst_15 : f32 to vector<8x12xf32>
    %15 = arith.mulf %14, %13 : vector<8x12xf32>
    %16 = arith.addf %12, %15 : vector<8x12xf32>
    %c0_16 = arith.constant 0 : index
    %c0_17 = arith.constant 0 : index
    %17 = vector.load %arg8[%c0_16, %c0_17] : memref<8x12xf32, #tpu.memory_space<vmem>>, vector<8x12xf32>
    tpu.vector_store %arg8[%c0_16, %c0_17], %16 {strides = array<i32>} : memref<8x12xf32, #tpu.memory_space<vmem>>, vector<8x12xf32>,
    %18 = arith.subf %0, %16 : vector<8x12xf32>
    %c0_18 = arith.constant 0 : index
    %c0_19 = arith.constant 0 : index
    %19 = vector.load %arg7[%c0_18, %c0_19] : memref<8x12xf32, #tpu.memory_space<vmem>>, vector<8x12xf32>
    tpu.vector_store %arg7[%c0_18, %c0_19], %18 {strides = array<i32>} : memref<8x12xf32, #tpu.memory_space<vmem>>, vector<8x12xf32>,
    return
  }
  func.func @transform_0(%arg0: i32) -> (i32, i32) {
    %c0_i32 = arith.constant 0 : i32
    %c0_i32_0 = arith.constant 0 : i32
    return %arg0, %c0_i32 : i32, i32
  }
  func.func @transform_1(%arg0: i32) -> (i32, i32) {
    %c0_i32 = arith.constant 0 : i32
    %c0_i32_0 = arith.constant 0 : i32
    return %arg0, %c0_i32 : i32, i32
  }
  func.func @transform_2(%arg0: i32) -> (i32, i32) {
    %c0_i32 = arith.constant 0 : i32
    %c0_i32_0 = arith.constant 0 : i32
    return %arg0, %c0_i32 : i32, i32
  }
  func.func @transform_3(%arg0: i32) -> (i32, i32) {
    %c0_i32 = arith.constant 0 : i32
    %c0_i32_0 = arith.constant 0 : i32
    %c0_i32_1 = arith.constant 0 : i32
    return %c0_i32, %c0_i32_0 : i32, i32
  }
  func.func @transform_4(%arg0: i32) -> (i32, i32) {
    %c0_i32 = arith.constant 0 : i32
    %c0_i32_0 = arith.constant 0 : i32
    %c0_i32_1 = arith.constant 0 : i32
    return %c0_i32, %c0_i32_0 : i32, i32
  }
  func.func @transform_5(%arg0: i32) -> (i32, i32) {
    %c0_i32 = arith.constant 0 : i32
    %c0_i32_0 = arith.constant 0 : i32
    %c0_i32_1 = arith.constant 0 : i32
    return %c0_i32, %c0_i32_0 : i32, i32
  }
  func.func @transform_6(%arg0: i32) -> (i32, i32) {
    %c0_i32 = arith.constant 0 : i32
    %c0_i32_0 = arith.constant 0 : i32
    return %arg0, %c0_i32 : i32, i32
  }
  func.func @transform_7(%arg0: i32) -> (i32, i32) {
    %c0_i32 = arith.constant 0 : i32
    %c0_i32_0 = arith.constant 0 : i32
    return %arg0, %c0_i32 : i32, i32
  }
}

</mosaic_0001>

<llo_original>
// kernel: tpu_custom_call.1
$region0: #{tpu_custom_call.1}
  #allocation0 [shape = 'u32[]', space=smem, size = 0x4, offset = 0x4, fixed_abs, tag = 'smem constant byte address 0x4 - core index']
  #allocation1 [shape = 'u32[144,128]{1,0:T(1,128)}', space=vmem, size = 0x12000, scoped, tag = 'internal scratch']
  %s0 = inlined_call_operand.vmem [shape: f32[16,12], index: 0, kind: input, shape index: {}]
  %s1 = inlined_call_operand.vmem [shape: f32[16,4], index: 1, kind: input, shape index: {}]
  %s2 = inlined_call_operand.vmem [shape: f32[16,12], index: 2, kind: input, shape index: {}]
  %s3 = inlined_call_operand.vmem [shape: f32[12,7], index: 3, kind: input, shape index: {}]
  %s4 = inlined_call_operand.hbm [shape: f32[4,7], index: 4, kind: input, shape index: {}]
  %s5 = inlined_call_operand.vmem [shape: f32[7,12], index: 5, kind: input, shape index: {}]
  %s6 = inlined_call_operand.hbm [shape: f32[16,12], index: 6, kind: output, shape index: {0}]
  %s7 = inlined_call_operand.hbm [shape: f32[16,12], index: 7, kind: output, shape index: {1}]
  %8 = xla_tuple %s6, %s7
  %s9 = sld [smem:[#allocation0]]
  $region69: #{tpu_custom_call.1} parent=0
    _
  %s11 = ssub.s32 1, %s9
  %s12 = scalar_select 0, %s11, %s9
  $region1: #{tpu_custom_call.1} parent=0
    #allocation2 [shape = 'u8[2048]{0}', space=vmem, size = 0x800, scoped, tag = 'input window, operand 4, single buffered']
    #allocation3 [shape = 's32[2]{0}', space=sflag, size = 0x8, scoped, tag = 'scoped memory for tpu_custom_call.1']
    #allocation4 [shape = 's32[2]{0}', space=sflag, size = 0x8, scoped, tag = 'scoped memory for tpu_custom_call.1']
    #allocation5 [shape = 'u8[8192]{0}', space=vmem, size = 0x2000, scoped, tag = 'output window, operand 0']
    #allocation6 [shape = 'u8[8192]{0}', space=vmem, size = 0x2000, scoped, tag = 'output window, operand 1']
    #allocation7 [shape = 's32[2]{0}', space=sflag, size = 0x8, scoped, tag = 'scoped memory for tpu_custom_call.1']
    %13 = vsyncpa [#allocation3], 0
    %14 = vsyncpa [#allocation4], 0
    %s15 = scalar_lea.sflag [#allocation4], 1
    %16 = vsyncpa %s15, 0
    %17 = vsyncpa [#allocation7], 0
    %s18 = scalar_lea.sflag [#allocation7], 1
    %19 = vsyncpa %s18, 0
    loop: start=0, step=1, limit=4
    $region2: #{tpu_custom_call.1} parent=1 // loop_pre_header
      _
    $region3: #{tpu_custom_call.1} parent=1 // loop_header
      %s21 = sphi 0, %s25
      %p22 = scmp.ge.s32.totalorder %s21, 4
      %s31 = sphi 0, %s33
      %s34 = sphi 0, %s31
      %s35 = sphi 0, %s34
      %s51 = sphi 0, %s35
      %s57 = sphi 0, %s59
      %s60 = sphi 0, %s57
      %s61 = sphi 0, %s60
      %s77 = sphi 0, %s61
      %s83 = sphi 0, %s85
      %s86 = sphi 0, %s83
      %s87 = sphi 0, %s86
      %s103 = sphi 0, %s87
      %s107 = sphi 0, %s107
      %s109 = sphi 0, %s107
      %s110 = sphi 0, %s109
      %s124 = sphi 0, %s110
      %s128 = sphi 0, %s128
      %s130 = sphi 0, %s128
      %s131 = sphi 0, %s130
      %s145 = sphi 0, %s131
      %s149 = sphi 0, %s149
      %s151 = sphi 0, %s149
      %s152 = sphi 0, %s151
      %s166 = sphi 0, %s152
      %s172 = sphi 0, %s174
      %s175 = sphi 0, %s172
      %s176 = sphi 0, %s175
      %s192 = sphi 0, %s176
      %s198 = sphi 0, %s200
      %s201 = sphi 0, %s198
      %s202 = sphi 0, %s201
      %s218 = sphi 0, %s202
    $region4: #{tpu_custom_call.1} parent=1 // loop_header_branch
      %24 = sbr.rel (%p22) target = $region8
    $region5: #{tpu_custom_call.1} parent=1 // loop_body
      %s26 = ssub.s32 %s21, 1
      %s27 = ssub.s32 %s21, 2
      %s28 = sadd.s32 %s21, 1
      %s29 = ssub.s32 %s21, %s28
      %p30 = scmp.eq.s32.totalorder %s29, 0
      %s32 = sadd.s32 %s31, 1
      %s33 = scalar_select %p30, %s31, %s32
      %p36 = pneg %p30
      %p37 = scmp.eq.s32.totalorder %s21, 1
      %p38 = por %p36, %p37
      %p39 = scmp.ne.s32.totalorder %s31, %s34
      %p40 = scmp.eq.s32.totalorder %s21, 0
      %p41 = por %p39, %p40
      %p42 = scmp.ne.s32.totalorder %s31, %s34
      %p43 = scmp.eq.s32.totalorder %s26, 1
      %p44 = por %p42, %p43
      %p45 = scmp.ne.s32.totalorder %s34, %s35
      %p46 = scmp.eq.s32.totalorder %s26, 0
      %p47 = por %p45, %p46
      %p48 = scmp.ne.s32.totalorder %s34, %s35
      %p49 = scmp.eq.s32.totalorder %s27, 1
      %p50 = por %p48, %p49
      %p52 = scmp.ne.s32.totalorder %s35, %s51
      %p53 = scmp.eq.s32.totalorder %s27, 0
      %p54 = por %p52, %p53
      %s55 = ssub.s32 %s21, %s28
      %p56 = scmp.eq.s32.totalorder %s55, 0
      %s58 = sadd.s32 %s57, 1
      %s59 = scalar_select %p56, %s57, %s58
      %p62 = pneg %p56
      %p63 = scmp.eq.s32.totalorder %s21, 1
      %p64 = por %p62, %p63
      %p65 = scmp.ne.s32.totalorder %s57, %s60
      %p66 = scmp.eq.s32.totalorder %s21, 0
      %p67 = por %p65, %p66
      %p68 = scmp.ne.s32.totalorder %s57, %s60
      %p69 = scmp.eq.s32.totalorder %s26, 1
      %p70 = por %p68, %p69
      %p71 = scmp.ne.s32.totalorder %s60, %s61
      %p72 = scmp.eq.s32.totalorder %s26, 0
      %p73 = por %p71, %p72
      %p74 = scmp.ne.s32.totalorder %s60, %s61
      %p75 = scmp.eq.s32.totalorder %s27, 1
      %p76 = por %p74, %p75
      %p78 = scmp.ne.s32.totalorder %s61, %s77
      %p79 = scmp.eq.s32.totalorder %s27, 0
      %p80 = por %p78, %p79
      %s81 = ssub.s32 %s21, %s28
      %p82 = scmp.eq.s32.totalorder %s81, 0
      %s84 = sadd.s32 %s83, 1
      %s85 = scalar_select %p82, %s83, %s84
      %p88 = pneg %p82
      %p89 = scmp.eq.s32.totalorder %s21, 1
      %p90 = por %p88, %p89
      %p91 = scmp.ne.s32.totalorder %s83, %s86
      %p92 = scmp.eq.s32.totalorder %s21, 0
      %p93 = por %p91, %p92
      %p94 = scmp.ne.s32.totalorder %s83, %s86
      %p95 = scmp.eq.s32.totalorder %s26, 1
      %p96 = por %p94, %p95
      %p97 = scmp.ne.s32.totalorder %s86, %s87
      %p98 = scmp.eq.s32.totalorder %s26, 0
      %p99 = por %p97, %p98
      %p100 = scmp.ne.s32.totalorder %s86, %s87
      %p101 = scmp.eq.s32.totalorder %s27, 1
      %p102 = por %p100, %p101
      %p104 = scmp.ne.s32.totalorder %s87, %s103
      %p105 = scmp.eq.s32.totalorder %s27, 0
      %p106 = por %p104, %p105
      %s108 = sadd.s32 %s107, 1
      %p111 = scmp.eq.s32.totalorder %s21, 1
      %p112 = scmp.ne.s32.totalorder %s107, %s109
      %p113 = scmp.eq.s32.totalorder %s21, 0
      %p114 = por %p112, %p113
      %p115 = scmp.ne.s32.totalorder %s107, %s109
      %p116 = scmp.eq.s32.totalorder %s26, 1
      %p117 = por %p115, %p116
      %p118 = scmp.ne.s32.totalorder %s109, %s110
      %p119 = scmp.eq.s32.totalorder %s26, 0
      %p120 = por %p118, %p119
      %p121 = scmp.ne.s32.totalorder %s109, %s110
      %p122 = scmp.eq.s32.totalorder %s27, 1
      %p123 = por %p121, %p122
      %p125 = scmp.ne.s32.totalorder %s110, %s124
      %p126 = scmp.eq.s32.totalorder %s27, 0
      %p127 = por %p125, %p126
      %s129 = sadd.s32 %s128, 1
      %p132 = scmp.eq.s32.totalorder %s21, 1
      %p133 = scmp.ne.s32.totalorder %s128, %s130
      %p134 = scmp.eq.s32.totalorder %s21, 0
      %p135 = por %p133, %p134
      %p136 = scmp.ne.s32.totalorder %s128, %s130
      %p137 = scmp.eq.s32.totalorder %s26, 1
      %p138 = por %p136, %p137
      %p139 = scmp.ne.s32.totalorder %s130, %s131
      %p140 = scmp.eq.s32.totalorder %s26, 0
      %p141 = por %p139, %p140
      %p142 = scmp.ne.s32.totalorder %s130, %s131
      %p143 = scmp.eq.s32.totalorder %s27, 1
      %p144 = por %p142, %p143
      %p146 = scmp.ne.s32.totalorder %s131, %s145
      %p147 = scmp.eq.s32.totalorder %s27, 0
      %p148 = por %p146, %p147
      %s150 = sadd.s32 %s149, 1
      %p153 = scmp.eq.s32.totalorder %s21, 1
      %p154 = scmp.ne.s32.totalorder %s149, %s151
      %p155 = scmp.eq.s32.totalorder %s21, 0
      %p156 = por %p154, %p155
      %p157 = scmp.ne.s32.totalorder %s149, %s151
      %p158 = scmp.eq.s32.totalorder %s26, 1
      %p159 = por %p157, %p158
      %p160 = scmp.ne.s32.totalorder %s151, %s152
      %p161 = scmp.eq.s32.totalorder %s26, 0
      %p162 = por %p160, %p161
      %p163 = scmp.ne.s32.totalorder %s151, %s152
      %p164 = scmp.eq.s32.totalorder %s27, 1
      %p165 = por %p163, %p164
      %p167 = scmp.ne.s32.totalorder %s152, %s166
      %p168 = scmp.eq.s32.totalorder %s27, 0
      %p169 = por %p167, %p168
      %s170 = ssub.s32 %s21, %s28
      %p171 = scmp.eq.s32.totalorder %s170, 0
      %s173 = sadd.s32 %s172, 1
      %s174 = scalar_select %p171, %s172, %s173
      %p177 = pneg %p171
      %p178 = scmp.eq.s32.totalorder %s21, 1
      %p179 = por %p177, %p178
      %p180 = scmp.ne.s32.totalorder %s172, %s175
      %p181 = scmp.eq.s32.totalorder %s21, 0
      %p182 = por %p180, %p181
      %p183 = scmp.ne.s32.totalorder %s172, %s175
      %p184 = scmp.eq.s32.totalorder %s26, 1
      %p185 = por %p183, %p184
      %p186 = scmp.ne.s32.totalorder %s175, %s176
      %p187 = scmp.eq.s32.totalorder %s26, 0
      %p188 = por %p186, %p187
      %p189 = scmp.ne.s32.totalorder %s175, %s176
      %p190 = scmp.eq.s32.totalorder %s27, 1
      %p191 = por %p189, %p190
      %p193 = scmp.ne.s32.totalorder %s176, %s192
      %p194 = scmp.eq.s32.totalorder %s27, 0
      %p195 = por %p193, %p194
      %s196 = ssub.s32 %s21, %s28
      %p197 = scmp.eq.s32.totalorder %s196, 0
      %s199 = sadd.s32 %s198, 1
      %s200 = scalar_select %p197, %s198, %s199
      %p203 = pneg %p197
      %p204 = scmp.eq.s32.totalorder %s21, 1
      %p205 = por %p203, %p204
      %p206 = scmp.ne.s32.totalorder %s198, %s201
      %p207 = scmp.eq.s32.totalorder %s21, 0
      %p208 = por %p206, %p207
      %p209 = scmp.ne.s32.totalorder %s198, %s201
      %p210 = scmp.eq.s32.totalorder %s26, 1
      %p211 = por %p209, %p210
      %p212 = scmp.ne.s32.totalorder %s201, %s202
      %p213 = scmp.eq.s32.totalorder %s26, 0
      %p214 = por %p212, %p213
      %p215 = scmp.ne.s32.totalorder %s201, %s202
      %p216 = scmp.eq.s32.totalorder %s27, 1
      %p217 = por %p215, %p216
      %p219 = scmp.ne.s32.totalorder %s202, %s218
      %p220 = scmp.eq.s32.totalorder %s27, 0
      %p221 = por %p219, %p220
      %p222 = scmp.le.s32.totalorder 1, %s21
      %p223 = scmp.lt.s32.totalorder %s21, 3
      %p224 = pnand %p222, %p223
      %p225 = pneg %p224
      // Predicated region
      $region9: #{tpu_custom_call.1} parent=5 // pred_check
        _
      $region10: #{tpu_custom_call.1} parent=5 // pred_check_branch
        %227 = sbr.rel (%p224) target = $region12
      $region11: #{tpu_custom_call.1} parent=5 // pred_region
        %s228 = ssub.s32 %s21, 1
        // Predicated region
        $region13: #{tpu_custom_call.1} parent=11 // pred_check
          %p229 = pneg %p120
        $region14: #{tpu_custom_call.1} parent=11 // pred_check_branch
          %231 = sbr.rel (%p229) target = $region16
        $region15: #{tpu_custom_call.1} parent=11 // pred_region
          _
        $region16: #{tpu_custom_call.1} parent=11 // pred_fallthru
          _
        // Predicated region
        $region17: #{tpu_custom_call.1} parent=11 // pred_check
          %p232 = pneg %p141
        $region18: #{tpu_custom_call.1} parent=11 // pred_check_branch
          %234 = sbr.rel (%p232) target = $region20
        $region19: #{tpu_custom_call.1} parent=11 // pred_region
          %s236 = ssub.s32 64, 64
          %237 = vsyncadd [#allocation3], %s236
          %s239 = sshll.u32 [#allocation2], 4
          %s240 = int_to_ptr.vmem [resolvable:$true] %s239
          %242 = dma.hbm_to_vmem [thread:$0]  %s4, 64, %s240, [#allocation3]
        $region20: #{tpu_custom_call.1} parent=11 // pred_fallthru
          _
        // Predicated region
        $region21: #{tpu_custom_call.1} parent=11 // pred_check
          %p243 = pneg %p162
        $region22: #{tpu_custom_call.1} parent=11 // pred_check_branch
          %245 = sbr.rel (%p243) target = $region24
        $region23: #{tpu_custom_call.1} parent=11 // pred_region
          _
        $region24: #{tpu_custom_call.1} parent=11 // pred_fallthru
          _
      $region12: #{tpu_custom_call.1} parent=5 // pred_fallthru
        _
      %p246 = scmp.lt.s32.totalorder %s21, 2
      // Predicated region
      $region25: #{tpu_custom_call.1} parent=5 // pred_check
        %p247 = pneg %p246
      $region26: #{tpu_custom_call.1} parent=5 // pred_check_branch
        %249 = sbr.rel (%p247) target = $region28
      $region27: #{tpu_custom_call.1} parent=5 // pred_region
        // Predicated region
        $region29: #{tpu_custom_call.1} parent=27 // pred_check
          %p250 = pneg %p41
        $region30: #{tpu_custom_call.1} parent=27 // pred_check_branch
          %252 = sbr.rel (%p250) target = $region32
        $region31: #{tpu_custom_call.1} parent=27 // pred_region
          %p253 = scmp.lt.s32.totalorder %s21, 1
          %s254 = scalar_select %p253, %s21, 1
          %s255 = smul.addr %s254, 8
          %s256 = scalar_lea.vmem %s0, %s255
        $region32: #{tpu_custom_call.1} parent=27 // pred_fallthru
          _
        // Predicated region
        $region33: #{tpu_custom_call.1} parent=27 // pred_check
          %p257 = pneg %p67
        $region34: #{tpu_custom_call.1} parent=27 // pred_check_branch
          %259 = sbr.rel (%p257) target = $region36
        $region35: #{tpu_custom_call.1} parent=27 // pred_region
          %p260 = scmp.lt.s32.totalorder %s21, 1
          %s261 = scalar_select %p260, %s21, 1
          %s262 = smul.addr %s261, 8
          %s263 = scalar_lea.vmem %s1, %s262
        $region36: #{tpu_custom_call.1} parent=27 // pred_fallthru
          _
        // Predicated region
        $region37: #{tpu_custom_call.1} parent=27 // pred_check
          %p264 = pneg %p93
        $region38: #{tpu_custom_call.1} parent=27 // pred_check_branch
          %266 = sbr.rel (%p264) target = $region40
        $region39: #{tpu_custom_call.1} parent=27 // pred_region
          %p267 = scmp.lt.s32.totalorder %s21, 1
          %s268 = scalar_select %p267, %s21, 1
          %s269 = smul.addr %s268, 8
          %s270 = scalar_lea.vmem %s2, %s269
        $region40: #{tpu_custom_call.1} parent=27 // pred_fallthru
          _
      $region28: #{tpu_custom_call.1} parent=5 // pred_fallthru
        _
      %p271 = scmp.le.s32.totalorder 1, %s21
      %p272 = scmp.lt.s32.totalorder %s21, 3
      %p273 = pnand %p271, %p272
      %p274 = pneg %p273
      // Predicated region
      $region41: #{tpu_custom_call.1} parent=5 // pred_check
        _
      $region42: #{tpu_custom_call.1} parent=5 // pred_check_branch
        %276 = sbr.rel (%p273) target = $region44
      $region43: #{tpu_custom_call.1} parent=5 // pred_region
        %s277 = ssub.s32 %s21, 1
        // Predicated region
        $region45: #{tpu_custom_call.1} parent=43 // pred_check
          %p278 = pneg %p141
        $region46: #{tpu_custom_call.1} parent=43 // pred_check_branch
          %280 = sbr.rel (%p278) target = $region48
        $region47: #{tpu_custom_call.1} parent=43 // pred_region
          %281 = dma.done [#allocation3], 64
        $region48: #{tpu_custom_call.1} parent=43 // pred_fallthru
          _
        %p282 = scmp.lt.s32.totalorder %s26, 1
        %s283 = scalar_select %p282, %s26, 1
        %s284 = smul.addr %s283, 8
        %s285 = scalar_lea.vmem %s0, %s284
        %p286 = pneg %p47
        %p287 = pneg %p44
        %p288 = scmp.lt.s32.totalorder %s26, 1
        %s289 = scalar_select %p288, %s26, 1
        %s290 = smul.addr %s289, 8
        %s291 = scalar_lea.vmem %s1, %s290
        %p292 = pneg %p73
        %p293 = pneg %p70
        %p294 = scmp.lt.s32.totalorder %s26, 1
        %s295 = scalar_select %p294, %s26, 1
        %s296 = smul.addr %s295, 8
        %s297 = scalar_lea.vmem %s2, %s296
        %p298 = pneg %p99
        %p299 = pneg %p96
        %p300 = pneg %p120
        %p301 = pneg %p117
        %p302 = pneg %p141
        %p303 = pneg %p138
        %p304 = pneg %p162
        %p305 = pneg %p159
        %p306 = pneg %p188
        %p307 = pneg %p185
        %s308 = sand.u32 %s175, 1
        %s309 = scalar_lea.sflag [#allocation4], %s308
        %s310 = sand.u32 %s175, 1
        %s311 = smul.addr %s310, 8
        %s312 = scalar_lea.vmem [#allocation5], %s311
        %p313 = pneg %p214
        %p314 = pneg %p211
        %s315 = sand.u32 %s201, 1
        %s316 = scalar_lea.sflag [#allocation7], %s315
        %s317 = sand.u32 %s201, 1
        %s318 = smul.addr %s317, 8
        %s319 = scalar_lea.vmem [#allocation6], %s318
        %p320 = scmp.lt.s32.totalorder %s26, 1
        %s321 = scalar_select %p320, %s26, 1
        %s322 = smul.addr %s321, 8
        %s323 = scalar_lea.vmem %s0, %s322
        %p324 = scmp.lt.s32.totalorder %s26, 1
        %s325 = scalar_select %p324, %s26, 1
        %s326 = smul.addr %s325, 8
        %s327 = scalar_lea.vmem %s1, %s326
        %p328 = scmp.lt.s32.totalorder %s26, 1
        %s329 = scalar_select %p328, %s26, 1
        %s330 = smul.addr %s329, 8
        %s331 = scalar_lea.vmem %s2, %s330
        %v332 = vld [vmem:[%s323] sm:$0xff]
        %v333 = vld [vmem:[%s3] sm:$0xff]
        %v334 = vld [vmem:[%s3 + $0x8] sm:$0xf]
        %v335 = vld [vmem:[%s327] sm:$0xff]
        %v336 = vld [vmem:[#allocation2] sm:$0xf]
        %vm337 = vcmask 31744
        %v339 = vsel %vm337, %v335, 0
        %vm341 = vcmask 1043456
        %v343 = vsel %vm341, %v336, 0
        %345 = vmatprep.subr.mxu0 0.0
        %346 = vmatpush1.msra.mxu0 0.0
        %347 = vmatprep.subr.mxu0 0.0
        %348 = vmatpush1.msra.mxu0 0.0
        %349 = vmatprep.subr.mxu0 0.0
        %350 = vmatpush1.msra.mxu0 0.0
        %351 = vmatprep.subr.mxu0 0.0
        %352 = vmatpush1.msra.mxu0 0.0
        %353 = vmatprep.subr.mxu0 0.0
        %354 = vmatpush1.msra.mxu0 0.0
        %355 = vmatprep.subr.mxu0 0.0
        %356 = vmatpush1.msra.mxu0 0.0
        %357 = vmatprep.subr.mxu0 0.0
        %358 = vmatpush1.msra.mxu0 0.0
        %359 = vmatprep.subr.mxu0 0.0
        %360 = vmatpush1.msra.mxu0 0.0
        %361 = vmatprep.subr.mxu0 0.0
        %362 = vmatpush1.msra.mxu0 0.0
        %363 = vmatprep.subr.mxu0 0.0
        %364 = vmatpush1.msra.mxu0 0.0
        %365 = vmatprep.subr.mxu0 0.0
        %366 = vmatpush1.msra.mxu0 0.0
        %367 = vmatprep.subr.mxu0 0.0
        %368 = vmatpush1.msra.mxu0 0.0
        %369 = vmatprep.subr.mxu0 0.0
        %370 = vmatpush1.msra.mxu0 0.0
        %371 = vmatprep.subr.mxu0 0.0
        %372 = vmatpush1.msra.mxu0 0.0
        %373 = vmatprep.subr.mxu0 0.0
        %374 = vmatpush1.msra.mxu0 0.0
        %375 = vmatprep.subr.mxu0 0.0
        %376 = vmatpush1.msra.mxu0 %v343
        %377 = vmatprep.subr.mxu0 0.0
        %378 = vmatpush2.msra.mxu0 0.0
        %379 = vmatprep.subr.mxu0 0.0
        %380 = vmatpush2.msra.mxu0 0.0
        %381 = vmatprep.subr.mxu0 0.0
        %382 = vmatpush2.msra.mxu0 0.0
        %383 = vmatprep.subr.mxu0 0.0
        %384 = vmatpush2.msra.mxu0 0.0
        %385 = vmatprep.subr.mxu0 0.0
        %386 = vmatpush2.msra.mxu0 0.0
        %387 = vmatprep.subr.mxu0 0.0
        %388 = vmatpush2.msra.mxu0 0.0
        %389 = vmatprep.subr.mxu0 0.0
        %390 = vmatpush2.msra.mxu0 0.0
        %391 = vmatprep.subr.mxu0 0.0
        %392 = vmatpush2.msra.mxu0 0.0
        %393 = vmatprep.subr.mxu0 0.0
        %394 = vmatpush2.msra.mxu0 0.0
        %395 = vmatprep.subr.mxu0 0.0
        %396 = vmatpush2.msra.mxu0 0.0
        %397 = vmatprep.subr.mxu0 0.0
        %398 = vmatpush2.msra.mxu0 0.0
        %399 = vmatprep.subr.mxu0 0.0
        %400 = vmatpush2.msra.mxu0 0.0
        %401 = vmatprep.subr.mxu0 0.0
        %402 = vmatpush2.msra.mxu0 0.0
        %403 = vmatprep.subr.mxu0 0.0
        %404 = vmatpush2.msra.mxu0 0.0
        %405 = vmatprep.subr.mxu0 0.0
        %406 = vmatpush2.msra.mxu0 0.0
        %407 = vmatprep.subr.mxu0 0.0
        %408 = vmatpush2.msra.mxu0 0.0
        %409 = vmatprep.mubr.f32.mxu0 0.0
        %410 = vmatmul.mubr.f32.gmra.mxu0 %v339
        %v411 = vpop.f32.mrf.mxu0
        %v412 = vadd.f32 0.0, %v411
        %v413 = vpop.f32.mrf.mxu0
        %414 = vdwg.mxu0
        %vm415 = vcmask 97280
        %v417 = vsel %vm415, %v332, 0
        %v420 = vsel %vm341, %v334, 0
        %422 = vmatprep.subr.mxu0 0.0
        %423 = vmatpush1.msra.mxu0 0.0
        %424 = vmatprep.subr.mxu0 0.0
        %425 = vmatpush1.msra.mxu0 0.0
        %426 = vmatprep.subr.mxu0 0.0
        %427 = vmatpush1.msra.mxu0 0.0
        %428 = vmatprep.subr.mxu0 0.0
        %429 = vmatpush1.msra.mxu0 0.0
        %430 = vmatprep.subr.mxu0 0.0
        %431 = vmatpush1.msra.mxu0 0.0
        %432 = vmatprep.subr.mxu0 0.0
        %433 = vmatpush1.msra.mxu0 0.0
        %434 = vmatprep.subr.mxu0 0.0
        %435 = vmatpush1.msra.mxu0 0.0
        %436 = vmatprep.subr.mxu0 0.0
        %437 = vmatpush1.msra.mxu0 0.0
        %438 = vmatprep.subr.mxu0 0.0
        %439 = vmatpush1.msra.mxu0 0.0
        %440 = vmatprep.subr.mxu0 0.0
        %441 = vmatpush1.msra.mxu0 0.0
        %442 = vmatprep.subr.mxu0 0.0
        %443 = vmatpush1.msra.mxu0 0.0
        %444 = vmatprep.subr.mxu0 0.0
        %445 = vmatpush1.msra.mxu0 0.0
        %446 = vmatprep.subr.mxu0 0.0
        %447 = vmatpush1.msra.mxu0 0.0
        %448 = vmatprep.subr.mxu0 0.0
        %449 = vmatpush1.msra.mxu0 0.0
        %450 = vmatprep.subr.mxu0 0.0
        %451 = vmatpush1.msra.mxu0 %v420
        %452 = vmatprep.subr.mxu0 0.0
        %453 = vmatpush1.msra.mxu0 %v333
        %454 = vmatprep.subr.mxu0 0.0
        %455 = vmatpush2.msra.mxu0 0.0
        %456 = vmatprep.subr.mxu0 0.0
        %457 = vmatpush2.msra.mxu0 0.0
        %458 = vmatprep.subr.mxu0 0.0
        %459 = vmatpush2.msra.mxu0 0.0
        %460 = vmatprep.subr.mxu0 0.0
        %461 = vmatpush2.msra.mxu0 0.0
        %462 = vmatprep.subr.mxu0 0.0
        %463 = vmatpush2.msra.mxu0 0.0
        %464 = vmatprep.subr.mxu0 0.0
        %465 = vmatpush2.msra.mxu0 0.0
        %466 = vmatprep.subr.mxu0 0.0
        %467 = vmatpush2.msra.mxu0 0.0
        %468 = vmatprep.subr.mxu0 0.0
        %469 = vmatpush2.msra.mxu0 0.0
        %470 = vmatprep.subr.mxu0 0.0
        %471 = vmatpush2.msra.mxu0 0.0
        %472 = vmatprep.subr.mxu0 0.0
        %473 = vmatpush2.msra.mxu0 0.0
        %474 = vmatprep.subr.mxu0 0.0
        %475 = vmatpush2.msra.mxu0 0.0
        %476 = vmatprep.subr.mxu0 0.0
        %477 = vmatpush2.msra.mxu0 0.0
        %478 = vmatprep.subr.mxu0 0.0
        %479 = vmatpush2.msra.mxu0 0.0
        %480 = vmatprep.subr.mxu0 0.0
        %481 = vmatpush2.msra.mxu0 0.0
        %482 = vmatprep.subr.mxu0 0.0
        %483 = vmatpush2.msra.mxu0 0.0
        %484 = vmatprep.subr.mxu0 0.0
        %485 = vmatpush2.msra.mxu0 0.0
        %486 = vmatprep.mubr.f32.mxu0 0.0
        %487 = vmatmul.mubr.f32.gmra.mxu0 %v417
        %v488 = vpop.f32.mrf.mxu0
        %v489 = vadd.f32 %v412, %v488
        %v490 = vpop.f32.mrf.mxu0
        %491 = vdwg.mxu0
        %v492 = vmax.f32 %v489, 0.0
        %v493 = vld [vmem:[%s5] sm:$0x7f]
        %v494 = vld [vmem:[%s331] sm:$0xff]
        %v495 = vmul.f32 %v494, 0.9
        %vm496 = vcmask 56320
        %v498 = vsel %vm496, %v492, 0
        %vm500 = vcmask 1046528
        %v502 = vsel %vm500, %v493, 0
        %504 = vmatprep.subr.mxu0 0.0
        %505 = vmatpush1.msra.mxu0 0.0
        %506 = vmatprep.subr.mxu0 0.0
        %507 = vmatpush1.msra.mxu0 0.0
        %508 = vmatprep.subr.mxu0 0.0
        %509 = vmatpush1.msra.mxu0 0.0
        %510 = vmatprep.subr.mxu0 0.0
        %511 = vmatpush1.msra.mxu0 0.0
        %512 = vmatprep.subr.mxu0 0.0
        %513 = vmatpush1.msra.mxu0 0.0
        %514 = vmatprep.subr.mxu0 0.0
        %515 = vmatpush1.msra.mxu0 0.0
        %516 = vmatprep.subr.mxu0 0.0
        %517 = vmatpush1.msra.mxu0 0.0
        %518 = vmatprep.subr.mxu0 0.0
        %519 = vmatpush1.msra.mxu0 0.0
        %520 = vmatprep.subr.mxu0 0.0
        %521 = vmatpush1.msra.mxu0 0.0
        %522 = vmatprep.subr.mxu0 0.0
        %523 = vmatpush1.msra.mxu0 0.0
        %524 = vmatprep.subr.mxu0 0.0
        %525 = vmatpush1.msra.mxu0 0.0
        %526 = vmatprep.subr.mxu0 0.0
        %527 = vmatpush1.msra.mxu0 0.0
        %528 = vmatprep.subr.mxu0 0.0
        %529 = vmatpush1.msra.mxu0 0.0
        %530 = vmatprep.subr.mxu0 0.0
        %531 = vmatpush1.msra.mxu0 0.0
        %532 = vmatprep.subr.mxu0 0.0
        %533 = vmatpush1.msra.mxu0 0.0
        %534 = vmatprep.subr.mxu0 0.0
        %535 = vmatpush1.msra.mxu0 %v502
        %536 = vmatprep.subr.mxu0 0.0
        %537 = vmatpush2.msra.mxu0 0.0
        %538 = vmatprep.subr.mxu0 0.0
        %539 = vmatpush2.msra.mxu0 0.0
        %540 = vmatprep.subr.mxu0 0.0
        %541 = vmatpush2.msra.mxu0 0.0
        %542 = vmatprep.subr.mxu0 0.0
        %543 = vmatpush2.msra.mxu0 0.0
        %544 = vmatprep.subr.mxu0 0.0
        %545 = vmatpush2.msra.mxu0 0.0
        %546 = vmatprep.subr.mxu0 0.0
        %547 = vmatpush2.msra.mxu0 0.0
        %548 = vmatprep.subr.mxu0 0.0
        %549 = vmatpush2.msra.mxu0 0.0
        %550 = vmatprep.subr.mxu0 0.0
        %551 = vmatpush2.msra.mxu0 0.0
        %552 = vmatprep.subr.mxu0 0.0
        %553 = vmatpush2.msra.mxu0 0.0
        %554 = vmatprep.subr.mxu0 0.0
        %555 = vmatpush2.msra.mxu0 0.0
        %556 = vmatprep.subr.mxu0 0.0
        %557 = vmatpush2.msra.mxu0 0.0
        %558 = vmatprep.subr.mxu0 0.0
        %559 = vmatpush2.msra.mxu0 0.0
        %560 = vmatprep.subr.mxu0 0.0
        %561 = vmatpush2.msra.mxu0 0.0
        %562 = vmatprep.subr.mxu0 0.0
        %563 = vmatpush2.msra.mxu0 0.0
        %564 = vmatprep.subr.mxu0 0.0
        %565 = vmatpush2.msra.mxu0 0.0
        %566 = vmatprep.subr.mxu0 0.0
        %567 = vmatpush2.msra.mxu0 0.0
        %568 = vmatprep.mubr.f32.mxu0 0.0
        %569 = vmatmul.mubr.f32.gmra.mxu0 %v498
        %v570 = vpop.f32.mrf.mxu0
        %v571 = vadd.f32 %v495, %v570
        %v572 = vpop.f32.mrf.mxu0
        %573 = vdwg.mxu0
        %574 = vst.msk [vmem:[%s319] sm:$0xff] %vm415, %v571
        %v575 = vsub.f32 %v332, %v571
        %576 = vst.msk [vmem:[%s312] sm:$0xff] %vm415, %v575
        %s577 = sand.u32 %s175, 1
        %s578 = scalar_lea.sflag [#allocation4], %s577
        %s579 = sand.u32 %s175, 1
        %s580 = smul.addr %s579, 8
        %s581 = scalar_lea.vmem [#allocation5], %s580
        %s582 = sand.u32 %s201, 1
        %s583 = scalar_lea.sflag [#allocation7], %s582
        %s584 = sand.u32 %s201, 1
        %s585 = smul.addr %s584, 8
        %s586 = scalar_lea.vmem [#allocation6], %s585
        // Predicated region
        $region49: #{tpu_custom_call.1} parent=43 // pred_check
          %p587 = pneg %p185
        $region50: #{tpu_custom_call.1} parent=43 // pred_check_branch
          %589 = sbr.rel (%p587) target = $region52
        $region51: #{tpu_custom_call.1} parent=43 // pred_region
          %s591 = ssub.s32 128, 128
          %592 = vsyncadd %s578, %s591
          %s593 = smul.addr %s26, 128
          %s594 = scalar_lea.hbm %s6, %s593
          %s596 = sshll.u32 %s581, 4
          %s597 = int_to_ptr.vmem [resolvable:$true] %s596
          %599 = dma.vmem_to_hbm [thread:$0]  %s597, 128, %s594, %s578
        $region52: #{tpu_custom_call.1} parent=43 // pred_fallthru
          _
        // Predicated region
        $region53: #{tpu_custom_call.1} parent=43 // pred_check
          %p600 = pneg %p211
        $region54: #{tpu_custom_call.1} parent=43 // pred_check_branch
          %602 = sbr.rel (%p600) target = $region56
        $region55: #{tpu_custom_call.1} parent=43 // pred_region
          %s604 = ssub.s32 128, 128
          %605 = vsyncadd %s583, %s604
          %s606 = smul.addr %s26, 128
          %s607 = scalar_lea.hbm %s7, %s606
          %s609 = sshll.u32 %s586, 4
          %s610 = int_to_ptr.vmem [resolvable:$true] %s609
          %612 = dma.vmem_to_hbm [thread:$0]  %s610, 128, %s607, %s583
        $region56: #{tpu_custom_call.1} parent=43 // pred_fallthru
          _
      $region44: #{tpu_custom_call.1} parent=5 // pred_fallthru
        _
      %p613 = scmp.le.s32.totalorder 2, %s21
      // Predicated region
      $region57: #{tpu_custom_call.1} parent=5 // pred_check
        %p614 = pneg %p613
      $region58: #{tpu_custom_call.1} parent=5 // pred_check_branch
        %616 = sbr.rel (%p614) target = $region60
      $region59: #{tpu_custom_call.1} parent=5 // pred_region
        %s617 = ssub.s32 %s21, 2
        // Predicated region
        $region61: #{tpu_custom_call.1} parent=59 // pred_check
          %p618 = pneg %p191
        $region62: #{tpu_custom_call.1} parent=59 // pred_check_branch
          %620 = sbr.rel (%p618) target = $region64
        $region63: #{tpu_custom_call.1} parent=59 // pred_region
          %s621 = sand.u32 %s176, 1
          %s622 = scalar_lea.sflag [#allocation4], %s621
          %s623 = sand.u32 %s176, 1
          %s624 = smul.addr %s623, 8
          %s625 = scalar_lea.vmem [#allocation5], %s624
          %626 = dma.done %s622, 128
        $region64: #{tpu_custom_call.1} parent=59 // pred_fallthru
          _
        // Predicated region
        $region65: #{tpu_custom_call.1} parent=59 // pred_check
          %p627 = pneg %p217
        $region66: #{tpu_custom_call.1} parent=59 // pred_check_branch
          %629 = sbr.rel (%p627) target = $region68
        $region67: #{tpu_custom_call.1} parent=59 // pred_region
          %s630 = sand.u32 %s202, 1
          %s631 = scalar_lea.sflag [#allocation7], %s630
          %s632 = sand.u32 %s202, 1
          %s633 = smul.addr %s632, 8
          %s634 = scalar_lea.vmem [#allocation6], %s633
          %635 = dma.done %s631, 128
        $region68: #{tpu_custom_call.1} parent=59 // pred_fallthru
          _
      $region60: #{tpu_custom_call.1} parent=5 // pred_fallthru
        _
    $region6: #{tpu_custom_call.1} parent=1 // loop_footer
      %s25 = sadd.s32 1, %s21
    $region7: #{tpu_custom_call.1} parent=1 // loop_footer_branch
      %20 = sbr.rel target = $region3
    $region8: #{tpu_custom_call.1} parent=1 // loop_exit
      _
    %636 = vsyncpa [#allocation3], 1
    %s637 = scalar_lea.sflag [#allocation3], 1
    %638 = vsyncpa %s637, 1
    %639 = vsyncpa [#allocation4], 1
    %s640 = scalar_lea.sflag [#allocation4], 1
    %641 = vsyncpa %s640, 1
    %642 = vsyncpa [#allocation7], 1
    %s643 = scalar_lea.sflag [#allocation7], 1
    %644 = vsyncpa %s643, 1

</llo_original>
